<compile_context>
chip_gen: v7x
topology: tpu7x:2x2x1
jax: 0.10.0
libtpu: 0.0.40
codegen_flags: <defaults>
</compile_context>

<pallas_src>
import functools

import jax
import jax.numpy as jnp
from jax.experimental import pallas as pl
from jax.experimental.pallas import tpu as pltpu

NUM_CATEG = 3
LATENT_DIM = 192
IN_DIM = LATENT_DIM + 2 * NUM_CATEG      # 198
HIDDEN = 256
OUT_DIM = 192
TM_MAX = 512                             # max batch-tile rows (sweep 512/1024 if desired)


def _round_up(x, m):
    return (x + m - 1) // m * m


def _cdiv(a, b):
    return (a + b - 1) // b


def _mlp_kernel(x_ref, cat_ref, w1_ref, wh_ref, w5_ref, b_ref, o_ref, lhs_scr):
    """Fused 5-layer MLP with the one-hot/concat folded into layer 1.

    x_ref  : (TM, 192) f32/bf16  latent rows for this batch tile
    cat_ref: (TM, 2)   int32     [forgery_categ, orig_categ]
    w1_ref : (256, 256) bf16     layer-1 weights (rows 0..191 latent, 192..197 categ, rest 0)
    wh_ref : (3, 256, 256) bf16  hidden layers 2..4
    w5_ref : (256, 192) bf16     last layer (unpadded)
    b_ref  : (5, 256)  f32       stacked biases (b5 zero-padded to 256)
    o_ref  : (TM, 192) f32
    lhs_scr: (TM, 256) bf16      VMEM scratch for the fused (latent | one-hot) LHS
    """
    tm = x_ref.shape[0]

    cats = cat_ref[...]                    # (TM, 2) int32
    fc = cats[:, 0:1]                      # (TM, 1)
    oc = cats[:, 1:2]                      # (TM, 1)

    # Build the fused LHS: cols 0..191 latent, 192..194 one-hot(forgery_categ),
    # 195..197 one-hot(orig_categ), 198..255 exactly zero (their W1 rows are zero).
    lane = jax.lax.broadcasted_iota(jnp.int32, (tm, HIDDEN), 1)
    onehot = ((lane == fc + LATENT_DIM)
              | (lane == oc + (LATENT_DIM + NUM_CATEG))).astype(jnp.bfloat16)
    lhs_scr[...] = onehot                                    # full-width, lane-dense store
    lhs_scr[:, :LATENT_DIM] = x_ref[...].astype(jnp.bfloat16)  # overwrite latent columns

    # Layer 1: one lane-aligned K=256 MXU pass (no separate categorical matmul).
    h = jnp.dot(lhs_scr[...], w1_ref[...], preferred_element_type=jnp.float32)
    h = jnp.maximum(h + b_ref[0:1, :], 0.0)

    # Layers 2..4 (Linear -> ReLU); bf16 weights, f32 accumulation & elementwise.
    for l in range(3):
        h = jnp.dot(h.astype(jnp.bfloat16), wh_ref[l],
                    preferred_element_type=jnp.float32)
        h = jnp.maximum(h + b_ref[l + 1:l + 2, :], 0.0)

    # Layer 5: true 192-wide output (full last dim of o_ref, no dead lanes).
    out = jnp.dot(h.astype(jnp.bfloat16), w5_ref[...],
                  preferred_element_type=jnp.float32)
    o_ref[...] = out + b_ref[4:5, :OUT_DIM]


def pack_params(params):
    """One-time conversion of the f32 (in,out) Linear params to the kernel layout."""
    (w1, b1), (w2, b2), (w3, b3), (w4, b4), (w5, b5) = params

    # Fold the 6 categorical rows into a single (256,256) W1 block (rows 198..255 zero).
    w1p = jnp.zeros((HIDDEN, HIDDEN), jnp.float32).at[:IN_DIM].set(w1)
    w1p = w1p.astype(jnp.bfloat16)                                   # (256, 256)
    wh = jnp.stack([w2, w3, w4], axis=0).astype(jnp.bfloat16)        # (3, 256, 256)
    w5b = w5.astype(jnp.bfloat16)                                    # (256, 192) unpadded
    b5p = jnp.zeros((1, HIDDEN), jnp.float32).at[:, :OUT_DIM].set(b5)
    bstack = jnp.concatenate([b1, b2, b3, b4, b5p], axis=0)          # (5, 256) f32
    return (w1p, wh, w5b, bstack)


def _choose_tile(batch):
    """Pick (tm, num_tiles) minimizing padding; >=2 grid steps once B >= 512."""
    if batch < 2 * HIDDEN:
        # One exact-size tile: block equals the full batch dim, zero padding.
        return max(batch, 1), 1
    nt = max(_cdiv(batch, TM_MAX), 2)     # >= 2 steps so both v7x TCs get work
    tm = _round_up(_cdiv(batch, nt), 8)
    nt = _cdiv(batch, tm)
    return tm, nt


@functools.partial(jax.jit, static_argnums=(3,))
def comrade_forward(forgery_latent, forgery_categ, orig_categ, num_categ, kparams):
    """Mirrors ComradeModel.forward; one-hot/concat are folded into the kernel."""
    assert num_categ == NUM_CATEG
    w1p, wh, w5b, bstack = kparams

    B = forgery_latent.shape[0]
    cats = jnp.stack([forgery_categ.astype(jnp.int32),
                      orig_categ.astype(jnp.int32)], axis=1)          # (B, 2)

    tm, nt = _choose_tile(B)
    bp = tm * nt

    latent = forgery_latent
    if bp != B:
        # At most ~8*nt padded rows (vs. up-to-2x before); only hit for large ragged B.
        pad = bp - B
        latent = jnp.pad(latent, ((0, pad), (0, 0)))
        cats = jnp.pad(cats, ((0, pad), (0, 0)))

    out = pl.pallas_call(
        _mlp_kernel,
        out_shape=jax.ShapeDtypeStruct((bp, OUT_DIM), jnp.float32),
        grid=(nt,),
        in_specs=[
            # batch-tiled activations / merged category ids
            pl.BlockSpec((tm, LATENT_DIM), lambda i: (i, 0)),
            pl.BlockSpec((tm, 2), lambda i: (i, 0)),
            # weights: constant index maps -> stay VMEM-resident across grid steps
            pl.BlockSpec((HIDDEN, HIDDEN), lambda i: (0, 0)),
            pl.BlockSpec((3, HIDDEN, HIDDEN), lambda i: (0, 0, 0)),
            pl.BlockSpec((HIDDEN, OUT_DIM), lambda i: (0, 0)),
            pl.BlockSpec((5, HIDDEN), lambda i: (0, 0)),
        ],
        out_specs=pl.BlockSpec((tm, OUT_DIM), lambda i: (i, 0)),
        scratch_shapes=[pltpu.VMEM((tm, HIDDEN), jnp.bfloat16)],
        compiler_params=pltpu.CompilerParams(
            dimension_semantics=("parallel",)),
    )(latent, cats, w1p, wh, w5b, bstack)

    return out if bp == B else out[:B]


def init_params(key):
    """Matches PyTorch Linear default init; weights stored as (in, out), f32."""
    dims = [(IN_DIM, HIDDEN), (HIDDEN, HIDDEN), (HIDDEN, HIDDEN),
            (HIDDEN, HIDDEN), (HIDDEN, OUT_DIM)]
    params = []
    for (fan_in, fan_out) in dims:
        key, kw, kb = jax.random.split(key, 3)
        bound = 1.0 / jnp.sqrt(fan_in)
        w = jax.random.uniform(kw, (fan_in, fan_out), jnp.float32,
                               minval=-bound, maxval=bound)
        b = jax.random.uniform(kb, (1, fan_out), jnp.float32,
                               minval=-bound, maxval=bound)
        params.append((w, b))
    return params


def reference_forward(forgery_latent, forgery_categ, orig_categ, num_categ, params):
    """Pure-JAX reference with the same bf16-weight / f32-accumulate numerics."""
    fo = jax.nn.one_hot(forgery_categ, num_categ, dtype=jnp.float32)
    oo = jax.nn.one_hot(orig_categ, num_categ, dtype=jnp.float32)
    h = jnp.concatenate([forgery_latent, fo, oo], axis=1)
    for i, (w, b) in enumerate(params):
        h = jnp.dot(h.astype(jnp.bfloat16), w.astype(jnp.bfloat16),
                    preferred_element_type=jnp.float32) + b
        if i < len(params) - 1:
            h = jnp.maximum(h, 0.0)
    return h


if __name__ == "__main__":
    key = jax.random.PRNGKey(0)
    kp, kl, kf, ko = jax.random.split(key, 4)

    params = init_params(kp)
    kparams = pack_params(params)   # one-time bf16 conversion / stacking

    B = 8
    forgery_latent = jax.random.normal(kl, (B, LATENT_DIM), jnp.float32)
    forgery_categ = jax.random.randint(kf, (B,), 0, NUM_CATEG, jnp.int32)
    orig_categ = jax.random.randint(ko, (B,), 0, NUM_CATEG, jnp.int32)

    out = comrade_forward(forgery_latent, forgery_categ, orig_categ,
                          NUM_CATEG, kparams)
    out = jax.block_until_ready(out)

    ref = reference_forward(forgery_latent, forgery_categ, orig_categ,
                            NUM_CATEG, params)
    assert out.shape == (B, OUT_DIM)
    assert jnp.allclose(out, ref, atol=1e-2, rtol=1e-2), \
        float(jnp.max(jnp.abs(out - ref)))

    print("KERNEL_OK")
</pallas_src>

<mosaic_0001>
module attributes {stable_mosaic.version = 11 : i64} {
  func.func @_mlp_kernel(%arg0: i32, %arg1: memref<8x192xf32, #tpu.memory_space<vmem>>, %arg2: memref<8x2xi32, #tpu.memory_space<vmem>>, %arg3: memref<256x256xbf16, #tpu.memory_space<vmem>>, %arg4: memref<3x256x256xbf16, #tpu.memory_space<vmem>>, %arg5: memref<256x192xbf16, #tpu.memory_space<vmem>>, %arg6: memref<5x256xf32, #tpu.memory_space<vmem>>, %arg7: memref<8x192xf32, #tpu.memory_space<vmem>>, %arg8: memref<8x256xbf16, #tpu.memory_space<vmem>>) attributes {dimension_semantics = [#tpu.dimension_semantics<parallel>], iteration_bounds = array<i64: 1>, scalar_prefetch = 0 : i64, scratch_operands = 1 : i64, tpu.core_type = #tpu.core_type<tc>, window_params = [{transform_indices = @transform_0, window_bounds = array<i64: 8, 192>}, {transform_indices = @transform_1, window_bounds = array<i64: 8, 2>}, {pipeline_mode = #tpu.pipeline_mode<synchronous>, transform_indices = @transform_2, window_bounds = array<i64: 256, 256>}, {pipeline_mode = #tpu.pipeline_mode<synchronous>, transform_indices = @transform_3, window_bounds = array<i64: 3, 256, 256>}, {pipeline_mode = #tpu.pipeline_mode<synchronous>, transform_indices = @transform_4, window_bounds = array<i64: 256, 192>}, {pipeline_mode = #tpu.pipeline_mode<synchronous>, transform_indices = @transform_5, window_bounds = array<i64: 5, 256>}, {transform_indices = @transform_6, window_bounds = array<i64: 8, 192>}]} {
    %c0 = arith.constant 0 : index
    %c0_0 = arith.constant 0 : index
    %0 = vector.load %arg2[%c0, %c0_0] : memref<8x2xi32, #tpu.memory_space<vmem>>, vector<8x2xi32>
    %1 = vector.extract_strided_slice %0 {offsets = [0, 0], sizes = [8, 1], strides = [1, 1]} : vector<8x2xi32> to vector<8x1xi32>
    %2 = vector.extract_strided_slice %0 {offsets = [0, 1], sizes = [8, 1], strides = [1, 1]} : vector<8x2xi32> to vector<8x1xi32>
    %3 = tpu.iota {dimensions = array<i32: 1>} : vector<8x256xi32>
    %c192_i32 = arith.constant 192 : i32
    %4 = vector.broadcast %c192_i32 : i32 to vector<8x1xi32>
    %5 = arith.addi %1, %4 : vector<8x1xi32>
    %6 = vector.broadcast %5 : vector<8x1xi32> to vector<8x256xi32>
    %7 = arith.cmpi eq, %3, %6 : vector<8x256xi32>
    %c195_i32 = arith.constant 195 : i32
    %8 = vector.broadcast %c195_i32 : i32 to vector<8x1xi32>
    %9 = arith.addi %2, %8 : vector<8x1xi32>
    %10 = vector.broadcast %9 : vector<8x1xi32> to vector<8x256xi32>
    %11 = arith.cmpi eq, %3, %10 : vector<8x256xi32>
    %12 = arith.ori %7, %11 : vector<8x256xi1>
    %13 = arith.extui %12 : vector<8x256xi1> to vector<8x256xi32>
    %14 = arith.sitofp %13 : vector<8x256xi32> to vector<8x256xf32>
    %15 = arith.truncf %14 : vector<8x256xf32> to vector<8x256xbf16>
    %c0_1 = arith.constant 0 : index
    %c0_2 = arith.constant 0 : index
    %16 = vector.load %arg8[%c0_1, %c0_2] : memref<8x256xbf16, #tpu.memory_space<vmem>>, vector<8x256xbf16>
    tpu.vector_store %arg8[%c0_1, %c0_2], %15 {strides = array<i32>} : memref<8x256xbf16, #tpu.memory_space<vmem>>, vector<8x256xbf16>,
    %c0_3 = arith.constant 0 : index
    %c0_4 = arith.constant 0 : index
    %17 = vector.load %arg1[%c0_3, %c0_4] : memref<8x192xf32, #tpu.memory_space<vmem>>, vector<8x192xf32>
    %18 = arith.truncf %17 : vector<8x192xf32> to vector<8x192xbf16>
    %c0_5 = arith.constant 0 : index
    %c0_6 = arith.constant 0 : index
    %19 = vector.load %arg8[%c0_5, %c0_6] : memref<8x256xbf16, #tpu.memory_space<vmem>>, vector<8x192xbf16>
    tpu.vector_store %arg8[%c0_5, %c0_6], %18 {strides = array<i32>} : memref<8x256xbf16, #tpu.memory_space<vmem>>, vector<8x192xbf16>,
    %c0_7 = arith.constant 0 : index
    %c0_8 = arith.constant 0 : index
    %20 = vector.load %arg8[%c0_7, %c0_8] : memref<8x256xbf16, #tpu.memory_space<vmem>>, vector<8x256xbf16>
    %c0_9 = arith.constant 0 : index
    %c0_10 = arith.constant 0 : index
    %21 = vector.load %arg3[%c0_9, %c0_10] : memref<256x256xbf16, #tpu.memory_space<vmem>>, vector<256x256xbf16>
    %cst = arith.constant dense<0.000000e+00> : vector<8x256xf32>
    %22 = tpu.matmul %20, %21, %cst {dimension_numbers = #tpu.dot_dimension_numbers<[1], [0], [0], [1], [0, 0, 1, 1], [], []>} : vector<8x256xbf16>, vector<256x256xbf16>, vector<8x256xf32> -> vector<8x256xf32>
    %c0_11 = arith.constant 0 : index
    %c0_12 = arith.constant 0 : index
    %23 = vector.load %arg6[%c0_11, %c0_12] : memref<5x256xf32, #tpu.memory_space<vmem>>, vector<1x256xf32>
    %24 = vector.broadcast %23 : vector<1x256xf32> to vector<8x256xf32>
    %25 = arith.addf %22, %24 : vector<8x256xf32>
    %cst_13 = arith.constant 0.000000e+00 : f32
    %26 = vector.broadcast %cst_13 : f32 to vector<8x256xf32>
    %27 = arith.maximumf %25, %26 : vector<8x256xf32>
    %28 = arith.truncf %27 : vector<8x256xf32> to vector<8x256xbf16>
    %c0_14 = arith.constant 0 : index
    %c0_15 = arith.constant 0 : index
    %c0_16 = arith.constant 0 : index
    %29 = vector.load %arg4[%c0_14, %c0_15, %c0_16] : memref<3x256x256xbf16, #tpu.memory_space<vmem>>, vector<1x256x256xbf16>
    %30 = vector.shape_cast %29 : vector<1x256x256xbf16> to vector<256x256xbf16>
    %cst_17 = arith.constant dense<0.000000e+00> : vector<8x256xf32>
    %31 = tpu.matmul %28, %30, %cst_17 {dimension_numbers = #tpu.dot_dimension_numbers<[1], [0], [0], [1], [0, 0, 1, 1], [], []>} : vector<8x256xbf16>, vector<256x256xbf16>, vector<8x256xf32> -> vector<8x256xf32>
    %c1 = arith.constant 1 : index
    %c0_18 = arith.constant 0 : index
    %32 = vector.load %arg6[%c1, %c0_18] : memref<5x256xf32, #tpu.memory_space<vmem>>, vector<1x256xf32>
    %33 = vector.broadcast %32 : vector<1x256xf32> to vector<8x256xf32>
    %34 = arith.addf %31, %33 : vector<8x256xf32>
    %cst_19 = arith.constant 0.000000e+00 : f32
    %35 = vector.broadcast %cst_19 : f32 to vector<8x256xf32>
    %36 = arith.maximumf %34, %35 : vector<8x256xf32>
    %37 = arith.truncf %36 : vector<8x256xf32> to vector<8x256xbf16>
    %c1_20 = arith.constant 1 : index
    %c0_21 = arith.constant 0 : index
    %c0_22 = arith.constant 0 : index
    %38 = vector.load %arg4[%c1_20, %c0_21, %c0_22] : memref<3x256x256xbf16, #tpu.memory_space<vmem>>, vector<1x256x256xbf16>
    %39 = vector.shape_cast %38 : vector<1x256x256xbf16> to vector<256x256xbf16>
    %cst_23 = arith.constant dense<0.000000e+00> : vector<8x256xf32>
    %40 = tpu.matmul %37, %39, %cst_23 {dimension_numbers = #tpu.dot_dimension_numbers<[1], [0], [0], [1], [0, 0, 1, 1], [], []>} : vector<8x256xbf16>, vector<256x256xbf16>, vector<8x256xf32> -> vector<8x256xf32>
    %c2 = arith.constant 2 : index
    %c0_24 = arith.constant 0 : index
    %41 = vector.load %arg6[%c2, %c0_24] : memref<5x256xf32, #tpu.memory_space<vmem>>, vector<1x256xf32>
    %42 = vector.broadcast %41 : vector<1x256xf32> to vector<8x256xf32>
    %43 = arith.addf %40, %42 : vector<8x256xf32>
    %cst_25 = arith.constant 0.000000e+00 : f32
    %44 = vector.broadcast %cst_25 : f32 to vector<8x256xf32>
    %45 = arith.maximumf %43, %44 : vector<8x256xf32>
    %46 = arith.truncf %45 : vector<8x256xf32> to vector<8x256xbf16>
    %c2_26 = arith.constant 2 : index
    %c0_27 = arith.constant 0 : index
    %c0_28 = arith.constant 0 : index
    %47 = vector.load %arg4[%c2_26, %c0_27, %c0_28] : memref<3x256x256xbf16, #tpu.memory_space<vmem>>, vector<1x256x256xbf16>
    %48 = vector.shape_cast %47 : vector<1x256x256xbf16> to vector<256x256xbf16>
    %cst_29 = arith.constant dense<0.000000e+00> : vector<8x256xf32>
    %49 = tpu.matmul %46, %48, %cst_29 {dimension_numbers = #tpu.dot_dimension_numbers<[1], [0], [0], [1], [0, 0, 1, 1], [], []>} : vector<8x256xbf16>, vector<256x256xbf16>, vector<8x256xf32> -> vector<8x256xf32>
    %c3 = arith.constant 3 : index
    %c0_30 = arith.constant 0 : index
    %50 = vector.load %arg6[%c3, %c0_30] : memref<5x256xf32, #tpu.memory_space<vmem>>, vector<1x256xf32>
    %51 = vector.broadcast %50 : vector<1x256xf32> to vector<8x256xf32>
    %52 = arith.addf %49, %51 : vector<8x256xf32>
    %cst_31 = arith.constant 0.000000e+00 : f32
    %53 = vector.broadcast %cst_31 : f32 to vector<8x256xf32>
    %54 = arith.maximumf %52, %53 : vector<8x256xf32>
    %55 = arith.truncf %54 : vector<8x256xf32> to vector<8x256xbf16>
    %c0_32 = arith.constant 0 : index
    %c0_33 = arith.constant 0 : index
    %56 = vector.load %arg5[%c0_32, %c0_33] : memref<256x192xbf16, #tpu.memory_space<vmem>>, vector<256x192xbf16>
    %cst_34 = arith.constant dense<0.000000e+00> : vector<8x192xf32>
    %57 = tpu.matmul %55, %56, %cst_34 {dimension_numbers = #tpu.dot_dimension_numbers<[1], [0], [0], [1], [0, 0, 1, 1], [], []>} : vector<8x256xbf16>, vector<256x192xbf16>, vector<8x192xf32> -> vector<8x192xf32>
    %c4 = arith.constant 4 : index
    %c0_35 = arith.constant 0 : index
    %58 = vector.load %arg6[%c4, %c0_35] : memref<5x256xf32, #tpu.memory_space<vmem>>, vector<1x192xf32>
    %59 = vector.broadcast %58 : vector<1x192xf32> to vector<8x192xf32>
    %60 = arith.addf %57, %59 : vector<8x192xf32>
    %c0_36 = arith.constant 0 : index
    %c0_37 = arith.constant 0 : index
    %61 = vector.load %arg7[%c0_36, %c0_37] : memref<8x192xf32, #tpu.memory_space<vmem>>, vector<8x192xf32>
    tpu.vector_store %arg7[%c0_36, %c0_37], %60 {strides = array<i32>} : memref<8x192xf32, #tpu.memory_space<vmem>>, vector<8x192xf32>,
    return
  }
  func.func @transform_0(%arg0: i32) -> (i32, i32) {
    %c0_i32 = arith.constant 0 : i32
    %c0_i32_0 = arith.constant 0 : i32
    return %arg0, %c0_i32 : i32, i32
  }
  func.func @transform_1(%arg0: i32) -> (i32, i32) {
    %c0_i32 = arith.constant 0 : i32
    %c0_i32_0 = arith.constant 0 : i32
    return %arg0, %c0_i32 : i32, i32
  }
  func.func @transform_2(%arg0: i32) -> (i32, i32) {
    %c0_i32 = arith.constant 0 : i32
    %c0_i32_0 = arith.constant 0 : i32
    %c0_i32_1 = arith.constant 0 : i32
    return %c0_i32, %c0_i32_0 : i32, i32
  }
  func.func @transform_3(%arg0: i32) -> (i32, i32, i32) {
    %c0_i32 = arith.constant 0 : i32
    %c0_i32_0 = arith.constant 0 : i32
    %c0_i32_1 = arith.constant 0 : i32
    %c0_i32_2 = arith.constant 0 : i32
    return %c0_i32, %c0_i32_0, %c0_i32_1 : i32, i32, i32
  }
  func.func @transform_4(%arg0: i32) -> (i32, i32) {
    %c0_i32 = arith.constant 0 : i32
    %c0_i32_0 = arith.constant 0 : i32
    %c0_i32_1 = arith.constant 0 : i32
    return %c0_i32, %c0_i32_0 : i32, i32
  }
  func.func @transform_5(%arg0: i32) -> (i32, i32) {
    %c0_i32 = arith.constant 0 : i32
    %c0_i32_0 = arith.constant 0 : i32
    %c0_i32_1 = arith.constant 0 : i32
    return %c0_i32, %c0_i32_0 : i32, i32
  }
  func.func @transform_6(%arg0: i32) -> (i32, i32) {
    %c0_i32 = arith.constant 0 : i32
    %c0_i32_0 = arith.constant 0 : i32
    return %arg0, %c0_i32 : i32, i32
  }
}

</mosaic_0001>

<llo_original>
// kernel: comrade_forward.1
$region0: #{comrade_forward.1}
  #allocation0 [shape = 'u32[]', space=smem, size = 0x4, offset = 0x4, fixed_abs, tag = 'smem constant byte address 0x4 - core index']
  #allocation1 [shape = 'u32[144,128]{1,0:T(1,128)}', space=vmem, size = 0x12000, scoped, tag = 'internal scratch']
  #allocation2 [shape = 'bf16[8,256]{1,0:T(8,128)(2,1)}', space=vmem, size = 0x1000, scoped, tag = 'scratch operand']
  %s0 = inlined_call_operand.vmem [shape: f32[8,192], index: 0, kind: input, shape index: {}]
  %s1 = inlined_call_operand.vmem [shape: s32[8,2], index: 1, kind: input, shape index: {}]
  %s2 = inlined_call_operand.vmem [shape: bf16[256,256], index: 2, kind: input, shape index: {}]
  %s3 = inlined_call_operand.hbm [shape: bf16[3,256,256], index: 3, kind: input, shape index: {}]
  %s4 = inlined_call_operand.vmem [shape: bf16[256,192], index: 4, kind: input, shape index: {}]
  %s5 = inlined_call_operand.vmem [shape: f32[5,256], index: 5, kind: input, shape index: {}]
  %s6 = inlined_call_operand.hbm [shape: f32[8,192], index: 6, kind: output, shape index: {}]
  %s7 = sld [smem:[#allocation0]]
  $region38: #{comrade_forward.1} parent=0
    _
  %s9 = ssub.s32 1, %s7
  %s10 = scalar_select 0, %s9, %s7
  $region1: #{comrade_forward.1} parent=0
    #allocation3 [shape = 'u8[393216]{0}', space=vmem, size = 0x60000, scoped, tag = 'input window, operand 3, single buffered']
    #allocation4 [shape = 's32[1]{0}', space=sflag, size = 0x4, scoped, tag = 'scoped memory for comrade_forward.1']
    #allocation5 [shape = 's32[1]{0}', space=sflag, size = 0x4, scoped, tag = 'scoped memory for comrade_forward.1']
    #allocation6 [shape = 'u8[8192]{0}', space=vmem, size = 0x2000, scoped, tag = 'output window, operand 0, single buffered']
    %11 = vsyncpa [#allocation4], 0
    %12 = vsyncpa [#allocation5], 0
    // Predicated region
    $region2: #{comrade_forward.1} parent=1 // pred_check
      _
    $region3: #{comrade_forward.1} parent=1 // pred_check_branch
      %14 = sbr.rel (0) target = $region5
    $region4: #{comrade_forward.1} parent=1 // pred_region
      _
    $region5: #{comrade_forward.1} parent=1 // pred_fallthru
      _
    // Predicated region
    $region6: #{comrade_forward.1} parent=1 // pred_check
      _
    $region7: #{comrade_forward.1} parent=1 // pred_check_branch
      %16 = sbr.rel (0) target = $region9
    $region8: #{comrade_forward.1} parent=1 // pred_region
      _
    $region9: #{comrade_forward.1} parent=1 // pred_fallthru
      _
    // Predicated region
    $region10: #{comrade_forward.1} parent=1 // pred_check
      _
    $region11: #{comrade_forward.1} parent=1 // pred_check_branch
      %18 = sbr.rel (0) target = $region13
    $region12: #{comrade_forward.1} parent=1 // pred_region
      _
    $region13: #{comrade_forward.1} parent=1 // pred_fallthru
      _
    // Predicated region
    $region14: #{comrade_forward.1} parent=1 // pred_check
      _
    $region15: #{comrade_forward.1} parent=1 // pred_check_branch
      %20 = sbr.rel (0) target = $region17
    $region16: #{comrade_forward.1} parent=1 // pred_region
      %s22 = ssub.s32 12288, 12288
      %23 = vsyncadd [#allocation4], %s22
      %s24 = sshll.u32 [#allocation3], 4
      %s25 = int_to_ptr.vmem [resolvable:$true] %s24
      %30 = dma.hbm_to_vmem [thread:$0]  %s3, 12288, %s25, [#allocation4], 128, 128, 8
    $region17: #{comrade_forward.1} parent=1 // pred_fallthru
      _
    // Predicated region
    $region18: #{comrade_forward.1} parent=1 // pred_check
      _
    $region19: #{comrade_forward.1} parent=1 // pred_check_branch
      %32 = sbr.rel (0) target = $region21
    $region20: #{comrade_forward.1} parent=1 // pred_region
      _
    $region21: #{comrade_forward.1} parent=1 // pred_fallthru
      _
    // Predicated region
    $region22: #{comrade_forward.1} parent=1 // pred_check
      _
    $region23: #{comrade_forward.1} parent=1 // pred_check_branch
      %34 = sbr.rel (0) target = $region25
    $region24: #{comrade_forward.1} parent=1 // pred_region
      _
    $region25: #{comrade_forward.1} parent=1 // pred_fallthru
      _
    // Predicated region
    $region26: #{comrade_forward.1} parent=1 // pred_check
      _
    $region27: #{comrade_forward.1} parent=1 // pred_check_branch
      %36 = sbr.rel (0) target = $region29
    $region28: #{comrade_forward.1} parent=1 // pred_region
      %37 = dma.done [#allocation4], 12288
    $region29: #{comrade_forward.1} parent=1 // pred_fallthru
      _
    %v38 = vld [vmem:[%s1] sm:$0xff]
    %v39 = vlaneseq
    %v40 = vand.u32 %v39, 127
    %v41 = vadd.s32 %v40, 128
    %v42 = vadd.s32 %v38, 192
    %43 = vset.pattern.permute.xlu0 0
    %44 = vperm.xlu0 %43, %v42
    %v45 = vpop.permute.xlu0 %44
    %vm46 = vcmp.eq.s32.totalorder %v40, %v45
    %vm47 = vcmp.eq.s32.totalorder %v41, %v45
    %v48 = vadd.s32 %v38, 195
    %49 = vset.pattern.permute.xlu0 1
    %50 = vperm.xlu0 %49, %v48
    %v51 = vpop.permute.xlu0 %50
    %vm52 = vcmp.eq.s32.totalorder %v40, %v51
    %vm53 = vcmp.eq.s32.totalorder %v41, %v51
    %vm54 = vmor %vm46, %vm52
    %vm55 = vmor %vm47, %vm53
    %v56 = vsel %vm54, 1, 0
    %v57 = vsel %vm55, 1, 0
    %v58 = vcvt.s32.f32 %v56
    %v59 = vcvt.s32.f32 %v57
    %v60 = vpack.c.bf16 %v58, %v58
    %v61 = vpack.c.bf16 %v59, %v59
    %v64 = vunpack.c.l.b16 %v60
    %v65 = vunpack.c.l.b16 %v61
    %v66 = vpack.c.b16 %v65, %v64
    %68 = vst [vmem:[#allocation2] sm:$0xff] %v66
    %v69 = vld [vmem:[%s0] sm:$0xff]
    %v70 = vld [vmem:[%s0 + $0x8] sm:$0xff]
    %v71 = vpack.c.bf16 %v69, %v69
    %v72 = vpack.c.bf16 %v70, %v70
    %v75 = vunpack.c.l.b16 %v71
    %v76 = vunpack.c.l.b16 %v72
    %v77 = vpack.c.b16 %v76, %v75
    %vm79 = vcmask 1043456
    %vm80 = vcmask 523268
    %vm81 = vmor %vm80, %vm79
    %82 = vst.msk [vmem:[#allocation2] sm:$0xff] %vm81, %v77
    %v83 = vld [vmem:[#allocation2] sm:$0xff]
    %v84 = vld [vmem:[%s2] sm:$0xff]
    %v85 = vld [vmem:[%s2 + $0x8] sm:$0xff]
    %v86 = vld [vmem:[%s2 + $0x10] sm:$0xff]
    %v87 = vld [vmem:[%s2 + $0x18] sm:$0xff]
    %v88 = vld [vmem:[%s2 + $0x20] sm:$0xff]
    %v89 = vld [vmem:[%s2 + $0x28] sm:$0xff]
    %v90 = vld [vmem:[%s2 + $0x30] sm:$0xff]
    %v91 = vld [vmem:[%s2 + $0x38] sm:$0xff]
    %v92 = vld [vmem:[%s2 + $0x40] sm:$0xff]
    %v93 = vld [vmem:[%s2 + $0x48] sm:$0xff]
    %v94 = vld [vmem:[%s2 + $0x50] sm:$0xff]
    %v95 = vld [vmem:[%s2 + $0x58] sm:$0xff]
    %v96 = vld [vmem:[%s2 + $0x60] sm:$0xff]
    %v97 = vld [vmem:[%s2 + $0x68] sm:$0xff]
    %v98 = vld [vmem:[%s2 + $0x70] sm:$0xff]
    %v99 = vld [vmem:[%s2 + $0x78] sm:$0xff]
    %v100 = vld [vmem:[%s2 + $0x80] sm:$0xff]
    %v101 = vld [vmem:[%s2 + $0x88] sm:$0xff]
    %v102 = vld [vmem:[%s2 + $0x90] sm:$0xff]
    %v103 = vld [vmem:[%s2 + $0x98] sm:$0xff]
    %v104 = vld [vmem:[%s2 + $0xa0] sm:$0xff]
    %v105 = vld [vmem:[%s2 + $0xa8] sm:$0xff]
    %v106 = vld [vmem:[%s2 + $0xb0] sm:$0xff]
    %v107 = vld [vmem:[%s2 + $0xb8] sm:$0xff]
    %v108 = vld [vmem:[%s2 + $0xc0] sm:$0xff]
    %v109 = vld [vmem:[%s2 + $0xc8] sm:$0xff]
    %v110 = vld [vmem:[%s2 + $0xd0] sm:$0xff]
    %v111 = vld [vmem:[%s2 + $0xd8] sm:$0xff]
    %v112 = vld [vmem:[%s2 + $0xe0] sm:$0xff]
    %v113 = vld [vmem:[%s2 + $0xe8] sm:$0xff]
    %v114 = vld [vmem:[%s2 + $0xf0] sm:$0xff]
    %v115 = vld [vmem:[%s2 + $0xf8] sm:$0xff]
    %v116 = vld [vmem:[%s5] ss:$8 sm:$0x3]
    %v118 = vlaneseq
    %v119 = vshrl.u32 %v118, 7
    %v120 = vsub.s32 0, %v119
    %v121 = vrot.slane %v116, %v120
    %v122 = vlaneseq
    %v123 = vshrl.u32 %v122, 7
    %v124 = vsub.s32 1, %v123
    %v125 = vrot.slane %v116, %v124
    %v129 = vunpack.c.l.b16 %v83
    %v130 = vunpack.c.h.b16 %v83
    %v131 = vpack.c.b16 %v129, %v129
    %v132 = vpack.c.b16 %v130, %v130
    %v167 = vunpack.c.l.b16 %v84
    %v168 = vunpack.c.h.b16 %v84
    %v169 = vunpack.c.l.b16 %v85
    %v170 = vunpack.c.h.b16 %v85
    %v171 = vunpack.c.l.b16 %v86
    %v172 = vunpack.c.h.b16 %v86
    %v173 = vunpack.c.l.b16 %v87
    %v174 = vunpack.c.h.b16 %v87
    %v175 = vunpack.c.l.b16 %v88
    %v176 = vunpack.c.h.b16 %v88
    %v177 = vunpack.c.l.b16 %v89
    %v178 = vunpack.c.h.b16 %v89
    %v179 = vunpack.c.l.b16 %v90
    %v180 = vunpack.c.h.b16 %v90
    %v181 = vunpack.c.l.b16 %v91
    %v182 = vunpack.c.h.b16 %v91
    %v183 = vunpack.c.l.b16 %v92
    %v184 = vunpack.c.h.b16 %v92
    %v185 = vunpack.c.l.b16 %v93
    %v186 = vunpack.c.h.b16 %v93
    %v187 = vunpack.c.l.b16 %v94
    %v188 = vunpack.c.h.b16 %v94
    %v189 = vunpack.c.l.b16 %v95
    %v190 = vunpack.c.h.b16 %v95
    %v191 = vunpack.c.l.b16 %v96
    %v192 = vunpack.c.h.b16 %v96
    %v193 = vunpack.c.l.b16 %v97
    %v194 = vunpack.c.h.b16 %v97
    %v195 = vunpack.c.l.b16 %v98
    %v196 = vunpack.c.h.b16 %v98
    %v197 = vunpack.c.l.b16 %v99
    %v198 = vunpack.c.h.b16 %v99
    %v199 = vunpack.c.l.b16 %v100
    %v200 = vunpack.c.h.b16 %v100
    %v201 = vunpack.c.l.b16 %v101
    %v202 = vunpack.c.h.b16 %v101
    %v203 = vunpack.c.l.b16 %v102
    %v204 = vunpack.c.h.b16 %v102
    %v205 = vunpack.c.l.b16 %v103
    %v206 = vunpack.c.h.b16 %v103
    %v207 = vunpack.c.l.b16 %v104
    %v208 = vunpack.c.h.b16 %v104
    %v209 = vunpack.c.l.b16 %v105
    %v210 = vunpack.c.h.b16 %v105
    %v211 = vunpack.c.l.b16 %v106
    %v212 = vunpack.c.h.b16 %v106
    %v213 = vunpack.c.l.b16 %v107
    %v214 = vunpack.c.h.b16 %v107
    %v215 = vunpack.c.l.b16 %v108
    %v216 = vunpack.c.h.b16 %v108
    %v217 = vunpack.c.l.b16 %v109
    %v218 = vunpack.c.h.b16 %v109
    %v219 = vunpack.c.l.b16 %v110
    %v220 = vunpack.c.h.b16 %v110
    %v221 = vunpack.c.l.b16 %v111
    %v222 = vunpack.c.h.b16 %v111
    %v223 = vunpack.c.l.b16 %v112
    %v224 = vunpack.c.h.b16 %v112
    %v225 = vunpack.c.l.b16 %v113
    %v226 = vunpack.c.h.b16 %v113
    %v227 = vunpack.c.l.b16 %v114
    %v228 = vunpack.c.h.b16 %v114
    %v229 = vunpack.c.l.b16 %v115
    %v230 = vunpack.c.h.b16 %v115
    %v231 = vpack.c.b16 %v169, %v167
    %v232 = vpack.c.b16 %v170, %v168
    %v233 = vpack.c.b16 %v173, %v171
    %v234 = vpack.c.b16 %v174, %v172
    %v235 = vpack.c.b16 %v177, %v175
    %v236 = vpack.c.b16 %v178, %v176
    %v237 = vpack.c.b16 %v181, %v179
    %v238 = vpack.c.b16 %v182, %v180
    %v239 = vpack.c.b16 %v185, %v183
    %v240 = vpack.c.b16 %v186, %v184
    %v241 = vpack.c.b16 %v189, %v187
    %v242 = vpack.c.b16 %v190, %v188
    %v243 = vpack.c.b16 %v193, %v191
    %v244 = vpack.c.b16 %v194, %v192
    %v245 = vpack.c.b16 %v197, %v195
    %v246 = vpack.c.b16 %v198, %v196
    %v247 = vpack.c.b16 %v201, %v199
    %v248 = vpack.c.b16 %v202, %v200
    %v249 = vpack.c.b16 %v205, %v203
    %v250 = vpack.c.b16 %v206, %v204
    %v251 = vpack.c.b16 %v209, %v207
    %v252 = vpack.c.b16 %v210, %v208
    %v253 = vpack.c.b16 %v213, %v211
    %v254 = vpack.c.b16 %v214, %v212
    %v255 = vpack.c.b16 %v217, %v215
    %v256 = vpack.c.b16 %v218, %v216
    %v257 = vpack.c.b16 %v221, %v219
    %v258 = vpack.c.b16 %v222, %v220
    %v259 = vpack.c.b16 %v225, %v223
    %v260 = vpack.c.b16 %v226, %v224
    %v261 = vpack.c.b16 %v229, %v227
    %v262 = vpack.c.b16 %v230, %v228
    %295 = vmatprep.subr.bf16.mxu0 %v232
    %296 = vmatpush1.bf16.msra.mxu0 %v231
    %297 = vmatprep.subr.bf16.mxu0 %v234
    %298 = vmatpush1.bf16.msra.mxu0 %v233
    %299 = vmatprep.subr.bf16.mxu0 %v236
    %300 = vmatpush1.bf16.msra.mxu0 %v235
    %301 = vmatprep.subr.bf16.mxu0 %v238
    %302 = vmatpush1.bf16.msra.mxu0 %v237
    %303 = vmatprep.subr.bf16.mxu0 %v240
    %304 = vmatpush1.bf16.msra.mxu0 %v239
    %305 = vmatprep.subr.bf16.mxu0 %v242
    %306 = vmatpush1.bf16.msra.mxu0 %v241
    %307 = vmatprep.subr.bf16.mxu0 %v244
    %308 = vmatpush1.bf16.msra.mxu0 %v243
    %309 = vmatprep.subr.bf16.mxu0 %v246
    %310 = vmatpush1.bf16.msra.mxu0 %v245
    %311 = vmatprep.subr.bf16.mxu0 %v248
    %312 = vmatpush1.bf16.msra.mxu0 %v247
    %313 = vmatprep.subr.bf16.mxu0 %v250
    %314 = vmatpush1.bf16.msra.mxu0 %v249
    %315 = vmatprep.subr.bf16.mxu0 %v252
    %316 = vmatpush1.bf16.msra.mxu0 %v251
    %317 = vmatprep.subr.bf16.mxu0 %v254
    %318 = vmatpush1.bf16.msra.mxu0 %v253
    %319 = vmatprep.subr.bf16.mxu0 %v256
    %320 = vmatpush1.bf16.msra.mxu0 %v255
    %321 = vmatprep.subr.bf16.mxu0 %v258
    %322 = vmatpush1.bf16.msra.mxu0 %v257
    %323 = vmatprep.subr.bf16.mxu0 %v260
    %324 = vmatpush1.bf16.msra.mxu0 %v259
    %325 = vmatprep.subr.bf16.mxu0 %v262
    %326 = vmatpush1.bf16.msra.mxu0 %v261
    %327 = vmatprep.mubr.bf16.mxu0 %v132
    %328 = vmatmul.mubr.bf16.gmra.mrb[0].mxu0 %v131
    %v329 = vpop.f32.mrb[0].mxu0
    %v330 = vadd.f32 %v121, %v329
    %v331 = vpop.f32.mrb[0].mxu0
    %v332 = vadd.f32 %v125, %v331
    %v333 = vpop.f32.mrb[0].mxu0
    %v334 = vpop.f32.mrb[0].mxu0
    %335 = vdwg.mxu0
    %v336 = vmax.f32 %v330, 0.0
    %v337 = vmax.f32 %v332, 0.0
    %v338 = vpack.c.bf16 %v336, %v336
    %v339 = vpack.c.bf16 %v337, %v337
    %v340 = vld [vmem:[#allocation3] sm:$0xff]
    %v341 = vld [vmem:[#allocation3 + $0x8] sm:$0xff]
    %v342 = vld [vmem:[#allocation3 + $0x10] sm:$0xff]
    %v343 = vld [vmem:[#allocation3 + $0x18] sm:$0xff]
    %v344 = vld [vmem:[#allocation3 + $0x20] sm:$0xff]
    %v345 = vld [vmem:[#allocation3 + $0x28] sm:$0xff]
    %v346 = vld [vmem:[#allocation3 + $0x30] sm:$0xff]
    %v347 = vld [vmem:[#allocation3 + $0x38] sm:$0xff]
    %v348 = vld [vmem:[#allocation3 + $0x40] sm:$0xff]
    %v349 = vld [vmem:[#allocation3 + $0x48] sm:$0xff]
    %v350 = vld [vmem:[#allocation3 + $0x50] sm:$0xff]
    %v351 = vld [vmem:[#allocation3 + $0x58] sm:$0xff]
    %v352 = vld [vmem:[#allocation3 + $0x60] sm:$0xff]
    %v353 = vld [vmem:[#allocation3 + $0x68] sm:$0xff]
    %v354 = vld [vmem:[#allocation3 + $0x70] sm:$0xff]
    %v355 = vld [vmem:[#allocation3 + $0x78] sm:$0xff]
    %v356 = vld [vmem:[#allocation3 + $0x80] sm:$0xff]
    %v357 = vld [vmem:[#allocation3 + $0x88] sm:$0xff]
    %v358 = vld [vmem:[#allocation3 + $0x90] sm:$0xff]
    %v359 = vld [vmem:[#allocation3 + $0x98] sm:$0xff]
    %v360 = vld [vmem:[#allocation3 + $0xa0] sm:$0xff]
    %v361 = vld [vmem:[#allocation3 + $0xa8] sm:$0xff]
    %v362 = vld [vmem:[#allocation3 + $0xb0] sm:$0xff]
    %v363 = vld [vmem:[#allocation3 + $0xb8] sm:$0xff]
    %v364 = vld [vmem:[#allocation3 + $0xc0] sm:$0xff]
    %v365 = vld [vmem:[#allocation3 + $0xc8] sm:$0xff]
    %v366 = vld [vmem:[#allocation3 + $0xd0] sm:$0xff]
    %v367 = vld [vmem:[#allocation3 + $0xd8] sm:$0xff]
    %v368 = vld [vmem:[#allocation3 + $0xe0] sm:$0xff]
    %v369 = vld [vmem:[#allocation3 + $0xe8] sm:$0xff]
    %v370 = vld [vmem:[#allocation3 + $0xf0] sm:$0xff]
    %v371 = vld [vmem:[#allocation3 + $0xf8] sm:$0xff]
    %s372 = scalar_lea.vmem %s5, 1
    %v373 = vld [vmem:[%s372] ss:$8 sm:$0x3]
    %v375 = vlaneseq
    %v376 = vshrl.u32 %v375, 7
    %v377 = vsub.s32 0, %v376
    %v378 = vrot.slane %v373, %v377
    %v379 = vlaneseq
    %v380 = vshrl.u32 %v379, 7
    %v381 = vsub.s32 1, %v380
    %v382 = vrot.slane %v373, %v381
    %v417 = vunpack.c.l.b16 %v340
    %v418 = vunpack.c.h.b16 %v340
    %v419 = vunpack.c.l.b16 %v341
    %v420 = vunpack.c.h.b16 %v341
    %v421 = vunpack.c.l.b16 %v342
    %v422 = vunpack.c.h.b16 %v342
    %v423 = vunpack.c.l.b16 %v343
    %v424 = vunpack.c.h.b16 %v343
    %v425 = vunpack.c.l.b16 %v344
    %v426 = vunpack.c.h.b16 %v344
    %v427 = vunpack.c.l.b16 %v345
    %v428 = vunpack.c.h.b16 %v345
    %v429 = vunpack.c.l.b16 %v346
    %v430 = vunpack.c.h.b16 %v346
    %v431 = vunpack.c.l.b16 %v347
    %v432 = vunpack.c.h.b16 %v347
    %v433 = vunpack.c.l.b16 %v348
    %v434 = vunpack.c.h.b16 %v348
    %v435 = vunpack.c.l.b16 %v349
    %v436 = vunpack.c.h.b16 %v349
    %v437 = vunpack.c.l.b16 %v350
    %v438 = vunpack.c.h.b16 %v350
    %v439 = vunpack.c.l.b16 %v351
    %v440 = vunpack.c.h.b16 %v351
    %v441 = vunpack.c.l.b16 %v352
    %v442 = vunpack.c.h.b16 %v352
    %v443 = vunpack.c.l.b16 %v353
    %v444 = vunpack.c.h.b16 %v353
    %v445 = vunpack.c.l.b16 %v354
    %v446 = vunpack.c.h.b16 %v354
    %v447 = vunpack.c.l.b16 %v355
    %v448 = vunpack.c.h.b16 %v355
    %v449 = vunpack.c.l.b16 %v356
    %v450 = vunpack.c.h.b16 %v356
    %v451 = vunpack.c.l.b16 %v357
    %v452 = vunpack.c.h.b16 %v357
    %v453 = vunpack.c.l.b16 %v358
    %v454 = vunpack.c.h.b16 %v358
    %v455 = vunpack.c.l.b16 %v359
    %v456 = vunpack.c.h.b16 %v359
    %v457 = vunpack.c.l.b16 %v360
    %v458 = vunpack.c.h.b16 %v360
    %v459 = vunpack.c.l.b16 %v361
    %v460 = vunpack.c.h.b16 %v361
    %v461 = vunpack.c.l.b16 %v362
    %v462 = vunpack.c.h.b16 %v362
    %v463 = vunpack.c.l.b16 %v363
    %v464 = vunpack.c.h.b16 %v363
    %v465 = vunpack.c.l.b16 %v364
    %v466 = vunpack.c.h.b16 %v364
    %v467 = vunpack.c.l.b16 %v365
    %v468 = vunpack.c.h.b16 %v365
    %v469 = vunpack.c.l.b16 %v366
    %v470 = vunpack.c.h.b16 %v366
    %v471 = vunpack.c.l.b16 %v367
    %v472 = vunpack.c.h.b16 %v367
    %v473 = vunpack.c.l.b16 %v368
    %v474 = vunpack.c.h.b16 %v368
    %v475 = vunpack.c.l.b16 %v369
    %v476 = vunpack.c.h.b16 %v369
    %v477 = vunpack.c.l.b16 %v370
    %v478 = vunpack.c.h.b16 %v370
    %v479 = vunpack.c.l.b16 %v371
    %v480 = vunpack.c.h.b16 %v371
    %v481 = vpack.c.b16 %v419, %v417
    %v482 = vpack.c.b16 %v420, %v418
    %v483 = vpack.c.b16 %v423, %v421
    %v484 = vpack.c.b16 %v424, %v422
    %v485 = vpack.c.b16 %v427, %v425
    %v486 = vpack.c.b16 %v428, %v426
    %v487 = vpack.c.b16 %v431, %v429
    %v488 = vpack.c.b16 %v432, %v430
    %v489 = vpack.c.b16 %v435, %v433
    %v490 = vpack.c.b16 %v436, %v434
    %v491 = vpack.c.b16 %v439, %v437
    %v492 = vpack.c.b16 %v440, %v438
    %v493 = vpack.c.b16 %v443, %v441
    %v494 = vpack.c.b16 %v444, %v442
    %v495 = vpack.c.b16 %v447, %v445
    %v496 = vpack.c.b16 %v448, %v446
    %v497 = vpack.c.b16 %v451, %v449
    %v498 = vpack.c.b16 %v452, %v450
    %v499 = vpack.c.b16 %v455, %v453
    %v500 = vpack.c.b16 %v456, %v454
    %v501 = vpack.c.b16 %v459, %v457
    %v502 = vpack.c.b16 %v460, %v458
    %v503 = vpack.c.b16 %v463, %v461
    %v504 = vpack.c.b16 %v464, %v462
    %v505 = vpack.c.b16 %v467, %v465
    %v506 = vpack.c.b16 %v468, %v466
    %v507 = vpack.c.b16 %v471, %v469
    %v508 = vpack.c.b16 %v472, %v470
    %v509 = vpack.c.b16 %v475, %v473
    %v510 = vpack.c.b16 %v476, %v474
    %v511 = vpack.c.b16 %v479, %v477
    %v512 = vpack.c.b16 %v480, %v478
    %545 = vmatprep.subr.bf16.mxu0 %v482
    %546 = vmatpush1.bf16.msra.mxu0 %v481
    %547 = vmatprep.subr.bf16.mxu0 %v484
    %548 = vmatpush1.bf16.msra.mxu0 %v483
    %549 = vmatprep.subr.bf16.mxu0 %v486
    %550 = vmatpush1.bf16.msra.mxu0 %v485
    %551 = vmatprep.subr.bf16.mxu0 %v488
    %552 = vmatpush1.bf16.msra.mxu0 %v487
    %553 = vmatprep.subr.bf16.mxu0 %v490
    %554 = vmatpush1.bf16.msra.mxu0 %v489
    %555 = vmatprep.subr.bf16.mxu0 %v492
    %556 = vmatpush1.bf16.msra.mxu0 %v491
    %557 = vmatprep.subr.bf16.mxu0 %v494
    %558 = vmatpush1.bf16.msra.mxu0 %v493
    %559 = vmatprep.subr.bf16.mxu0 %v496
    %560 = vmatpush1.bf16.msra.mxu0 %v495
    %561 = vmatprep.subr.bf16.mxu0 %v498
    %562 = vmatpush1.bf16.msra.mxu0 %v497
    %563 = vmatprep.subr.bf16.mxu0 %v500
    %564 = vmatpush1.bf16.msra.mxu0 %v499
    %565 = vmatprep.subr.bf16.mxu0 %v502
    %566 = vmatpush1.bf16.msra.mxu0 %v501
    %567 = vmatprep.subr.bf16.mxu0 %v504
    %568 = vmatpush1.bf16.msra.mxu0 %v503
    %569 = vmatprep.subr.bf16.mxu0 %v506
    %570 = vmatpush1.bf16.msra.mxu0 %v505
    %571 = vmatprep.subr.bf16.mxu0 %v508
    %572 = vmatpush1.bf16.msra.mxu0 %v507
    %573 = vmatprep.subr.bf16.mxu0 %v510
    %574 = vmatpush1.bf16.msra.mxu0 %v509
    %575 = vmatprep.subr.bf16.mxu0 %v512
    %576 = vmatpush1.bf16.msra.mxu0 %v511
    %577 = vmatprep.mubr.bf16.mxu0 %v339
    %578 = vmatmul.mubr.bf16.gmra.mrb[0].mxu0 %v338
    %v579 = vpop.f32.mrb[0].mxu0
    %v580 = vadd.f32 %v378, %v579
    %v581 = vpop.f32.mrb[0].mxu0
    %v582 = vadd.f32 %v382, %v581
    %v583 = vpop.f32.mrb[0].mxu0
    %v584 = vpop.f32.mrb[0].mxu0
    %585 = vdwg.mxu0
    %v586 = vmax.f32 %v580, 0.0
    %v587 = vmax.f32 %v582, 0.0
    %v588 = vpack.c.bf16 %v586, %v586
    %v589 = vpack.c.bf16 %v587, %v587
    %s590 = scalar_lea.vmem [#allocation3], 256
    %v591 = vld [vmem:[%s590] sm:$0xff]
    %v592 = vld [vmem:[%s590 + $0x8] sm:$0xff]
    %v593 = vld [vmem:[%s590 + $0x10] sm:$0xff]
    %v594 = vld [vmem:[%s590 + $0x18] sm:$0xff]
    %v595 = vld [vmem:[%s590 + $0x20] sm:$0xff]
    %v596 = vld [vmem:[%s590 + $0x28] sm:$0xff]
    %v597 = vld [vmem:[%s590 + $0x30] sm:$0xff]
    %v598 = vld [vmem:[%s590 + $0x38] sm:$0xff]
    %v599 = vld [vmem:[%s590 + $0x40] sm:$0xff]
    %v600 = vld [vmem:[%s590 + $0x48] sm:$0xff]
    %v601 = vld [vmem:[%s590 + $0x50] sm:$0xff]
    %v602 = vld [vmem:[%s590 + $0x58] sm:$0xff]
    %v603 = vld [vmem:[%s590 + $0x60] sm:$0xff]
    %v604 = vld [vmem:[%s590 + $0x68] sm:$0xff]
    %v605 = vld [vmem:[%s590 + $0x70] sm:$0xff]
    %v606 = vld [vmem:[%s590 + $0x78] sm:$0xff]
    %v607 = vld [vmem:[%s590 + $0x80] sm:$0xff]
    %v608 = vld [vmem:[%s590 + $0x88] sm:$0xff]
    %v609 = vld [vmem:[%s590 + $0x90] sm:$0xff]
    %v610 = vld [vmem:[%s590 + $0x98] sm:$0xff]
    %v611 = vld [vmem:[%s590 + $0xa0] sm:$0xff]
    %v612 = vld [vmem:[%s590 + $0xa8] sm:$0xff]
    %v613 = vld [vmem:[%s590 + $0xb0] sm:$0xff]
    %v614 = vld [vmem:[%s590 + $0xb8] sm:$0xff]
    %v615 = vld [vmem:[%s590 + $0xc0] sm:$0xff]
    %v616 = vld [vmem:[%s590 + $0xc8] sm:$0xff]
    %v617 = vld [vmem:[%s590 + $0xd0] sm:$0xff]
    %v618 = vld [vmem:[%s590 + $0xd8] sm:$0xff]
    %v619 = vld [vmem:[%s590 + $0xe0] sm:$0xff]
    %v620 = vld [vmem:[%s590 + $0xe8] sm:$0xff]
    %v621 = vld [vmem:[%s590 + $0xf0] sm:$0xff]
    %v622 = vld [vmem:[%s590 + $0xf8] sm:$0xff]
    %s623 = scalar_lea.vmem %s5, 2
    %v624 = vld [vmem:[%s623] ss:$8 sm:$0x3]
    %v626 = vlaneseq
    %v627 = vshrl.u32 %v626, 7
    %v628 = vsub.s32 0, %v627
    %v629 = vrot.slane %v624, %v628
    %v630 = vlaneseq
    %v631 = vshrl.u32 %v630, 7
    %v632 = vsub.s32 1, %v631
    %v633 = vrot.slane %v624, %v632
    %v668 = vunpack.c.l.b16 %v591
    %v669 = vunpack.c.h.b16 %v591
    %v670 = vunpack.c.l.b16 %v592
    %v671 = vunpack.c.h.b16 %v592
    %v672 = vunpack.c.l.b16 %v593
    %v673 = vunpack.c.h.b16 %v593
    %v674 = vunpack.c.l.b16 %v594
    %v675 = vunpack.c.h.b16 %v594
    %v676 = vunpack.c.l.b16 %v595
    %v677 = vunpack.c.h.b16 %v595
    %v678 = vunpack.c.l.b16 %v596
    %v679 = vunpack.c.h.b16 %v596
    %v680 = vunpack.c.l.b16 %v597
    %v681 = vunpack.c.h.b16 %v597
    %v682 = vunpack.c.l.b16 %v598
    %v683 = vunpack.c.h.b16 %v598
    %v684 = vunpack.c.l.b16 %v599
    %v685 = vunpack.c.h.b16 %v599
    %v686 = vunpack.c.l.b16 %v600
    %v687 = vunpack.c.h.b16 %v600
    %v688 = vunpack.c.l.b16 %v601
    %v689 = vunpack.c.h.b16 %v601
    %v690 = vunpack.c.l.b16 %v602
    %v691 = vunpack.c.h.b16 %v602
    %v692 = vunpack.c.l.b16 %v603
    %v693 = vunpack.c.h.b16 %v603
    %v694 = vunpack.c.l.b16 %v604
    %v695 = vunpack.c.h.b16 %v604
    %v696 = vunpack.c.l.b16 %v605
    %v697 = vunpack.c.h.b16 %v605
    %v698 = vunpack.c.l.b16 %v606
    %v699 = vunpack.c.h.b16 %v606
    %v700 = vunpack.c.l.b16 %v607
    %v701 = vunpack.c.h.b16 %v607
    %v702 = vunpack.c.l.b16 %v608
    %v703 = vunpack.c.h.b16 %v608
    %v704 = vunpack.c.l.b16 %v609
    %v705 = vunpack.c.h.b16 %v609
    %v706 = vunpack.c.l.b16 %v610
    %v707 = vunpack.c.h.b16 %v610
    %v708 = vunpack.c.l.b16 %v611
    %v709 = vunpack.c.h.b16 %v611
    %v710 = vunpack.c.l.b16 %v612
    %v711 = vunpack.c.h.b16 %v612
    %v712 = vunpack.c.l.b16 %v613
    %v713 = vunpack.c.h.b16 %v613
    %v714 = vunpack.c.l.b16 %v614
    %v715 = vunpack.c.h.b16 %v614
    %v716 = vunpack.c.l.b16 %v615
    %v717 = vunpack.c.h.b16 %v615
    %v718 = vunpack.c.l.b16 %v616
    %v719 = vunpack.c.h.b16 %v616
    %v720 = vunpack.c.l.b16 %v617
    %v721 = vunpack.c.h.b16 %v617
    %v722 = vunpack.c.l.b16 %v618
    %v723 = vunpack.c.h.b16 %v618
    %v724 = vunpack.c.l.b16 %v619
    %v725 = vunpack.c.h.b16 %v619
    %v726 = vunpack.c.l.b16 %v620
    %v727 = vunpack.c.h.b16 %v620
    %v728 = vunpack.c.l.b16 %v621
    %v729 = vunpack.c.h.b16 %v621
    %v730 = vunpack.c.l.b16 %v622
    %v731 = vunpack.c.h.b16 %v622
    %v732 = vpack.c.b16 %v670, %v668
    %v733 = vpack.c.b16 %v671, %v669
    %v734 = vpack.c.b16 %v674, %v672
    %v735 = vpack.c.b16 %v675, %v673
    %v736 = vpack.c.b16 %v678, %v676
    %v737 = vpack.c.b16 %v679, %v677
    %v738 = vpack.c.b16 %v682, %v680
    %v739 = vpack.c.b16 %v683, %v681
    %v740 = vpack.c.b16 %v686, %v684
    %v741 = vpack.c.b16 %v687, %v685
    %v742 = vpack.c.b16 %v690, %v688
    %v743 = vpack.c.b16 %v691, %v689
    %v744 = vpack.c.b16 %v694, %v692
    %v745 = vpack.c.b16 %v695, %v693
    %v746 = vpack.c.b16 %v698, %v696
    %v747 = vpack.c.b16 %v699, %v697
    %v748 = vpack.c.b16 %v702, %v700
    %v749 = vpack.c.b16 %v703, %v701
    %v750 = vpack.c.b16 %v706, %v704
    %v751 = vpack.c.b16 %v707, %v705
    %v752 = vpack.c.b16 %v710, %v708
    %v753 = vpack.c.b16 %v711, %v709
    %v754 = vpack.c.b16 %v714, %v712
    %v755 = vpack.c.b16 %v715, %v713
    %v756 = vpack.c.b16 %v718, %v716
    %v757 = vpack.c.b16 %v719, %v717
    %v758 = vpack.c.b16 %v722, %v720
    %v759 = vpack.c.b16 %v723, %v721
    %v760 = vpack.c.b16 %v726, %v724
    %v761 = vpack.c.b16 %v727, %v725
    %v762 = vpack.c.b16 %v730, %v728
    %v763 = vpack.c.b16 %v731, %v729
    %796 = vmatprep.subr.bf16.mxu0 %v733
    %797 = vmatpush1.bf16.msra.mxu0 %v732
    %798 = vmatprep.subr.bf16.mxu0 %v735
    %799 = vmatpush1.bf16.msra.mxu0 %v734
    %800 = vmatprep.subr.bf16.mxu0 %v737
    %801 = vmatpush1.bf16.msra.mxu0 %v736
    %802 = vmatprep.subr.bf16.mxu0 %v739
    %803 = vmatpush1.bf16.msra.mxu0 %v738
    %804 = vmatprep.subr.bf16.mxu0 %v741
    %805 = vmatpush1.bf16.msra.mxu0 %v740
    %806 = vmatprep.subr.bf16.mxu0 %v743
    %807 = vmatpush1.bf16.msra.mxu0 %v742
    %808 = vmatprep.subr.bf16.mxu0 %v745
    %809 = vmatpush1.bf16.msra.mxu0 %v744
    %810 = vmatprep.subr.bf16.mxu0 %v747
    %811 = vmatpush1.bf16.msra.mxu0 %v746
    %812 = vmatprep.subr.bf16.mxu0 %v749
    %813 = vmatpush1.bf16.msra.mxu0 %v748
    %814 = vmatprep.subr.bf16.mxu0 %v751
    %815 = vmatpush1.bf16.msra.mxu0 %v750
    %816 = vmatprep.subr.bf16.mxu0 %v753
    %817 = vmatpush1.bf16.msra.mxu0 %v752
    %818 = vmatprep.subr.bf16.mxu0 %v755
    %819 = vmatpush1.bf16.msra.mxu0 %v754
    %820 = vmatprep.subr.bf16.mxu0 %v757
    %821 = vmatpush1.bf16.msra.mxu0 %v756
    %822 = vmatprep.subr.bf16.mxu0 %v759
    %823 = vmatpush1.bf16.msra.mxu0 %v758
    %824 = vmatprep.subr.bf16.mxu0 %v761
    %825 = vmatpush1.bf16.msra.mxu0 %v760
    %826 = vmatprep.subr.bf16.mxu0 %v763
    %827 = vmatpush1.bf16.msra.mxu0 %v762
    %828 = vmatprep.mubr.bf16.mxu0 %v589
    %829 = vmatmul.mubr.bf16.gmra.mrb[0].mxu0 %v588
    %v830 = vpop.f32.mrb[0].mxu0
    %v831 = vadd.f32 %v629, %v830
    %v832 = vpop.f32.mrb[0].mxu0
    %v833 = vadd.f32 %v633, %v832
    %v834 = vpop.f32.mrb[0].mxu0
    %v835 = vpop.f32.mrb[0].mxu0
    %836 = vdwg.mxu0
    %v837 = vmax.f32 %v831, 0.0
    %v838 = vmax.f32 %v833, 0.0
    %v839 = vpack.c.bf16 %v837, %v837
    %v840 = vpack.c.bf16 %v838, %v838
    %s841 = scalar_lea.vmem [#allocation3], 512
    %v842 = vld [vmem:[%s841] sm:$0xff]
    %v843 = vld [vmem:[%s841 + $0x8] sm:$0xff]
    %v844 = vld [vmem:[%s841 + $0x10] sm:$0xff]
    %v845 = vld [vmem:[%s841 + $0x18] sm:$0xff]
    %v846 = vld [vmem:[%s841 + $0x20] sm:$0xff]
    %v847 = vld [vmem:[%s841 + $0x28] sm:$0xff]
    %v848 = vld [vmem:[%s841 + $0x30] sm:$0xff]
    %v849 = vld [vmem:[%s841 + $0x38] sm:$0xff]
    %v850 = vld [vmem:[%s841 + $0x40] sm:$0xff]
    %v851 = vld [vmem:[%s841 + $0x48] sm:$0xff]
    %v852 = vld [vmem:[%s841 + $0x50] sm:$0xff]
    %v853 = vld [vmem:[%s841 + $0x58] sm:$0xff]
    %v854 = vld [vmem:[%s841 + $0x60] sm:$0xff]
    %v855 = vld [vmem:[%s841 + $0x68] sm:$0xff]
    %v856 = vld [vmem:[%s841 + $0x70] sm:$0xff]
    %v857 = vld [vmem:[%s841 + $0x78] sm:$0xff]
    %v858 = vld [vmem:[%s841 + $0x80] sm:$0xff]
    %v859 = vld [vmem:[%s841 + $0x88] sm:$0xff]
    %v860 = vld [vmem:[%s841 + $0x90] sm:$0xff]
    %v861 = vld [vmem:[%s841 + $0x98] sm:$0xff]
    %v862 = vld [vmem:[%s841 + $0xa0] sm:$0xff]
    %v863 = vld [vmem:[%s841 + $0xa8] sm:$0xff]
    %v864 = vld [vmem:[%s841 + $0xb0] sm:$0xff]
    %v865 = vld [vmem:[%s841 + $0xb8] sm:$0xff]
    %v866 = vld [vmem:[%s841 + $0xc0] sm:$0xff]
    %v867 = vld [vmem:[%s841 + $0xc8] sm:$0xff]
    %v868 = vld [vmem:[%s841 + $0xd0] sm:$0xff]
    %v869 = vld [vmem:[%s841 + $0xd8] sm:$0xff]
    %v870 = vld [vmem:[%s841 + $0xe0] sm:$0xff]
    %v871 = vld [vmem:[%s841 + $0xe8] sm:$0xff]
    %v872 = vld [vmem:[%s841 + $0xf0] sm:$0xff]
    %v873 = vld [vmem:[%s841 + $0xf8] sm:$0xff]
    %s874 = scalar_lea.vmem %s5, 3
    %v875 = vld [vmem:[%s874] ss:$8 sm:$0x3]
    %v877 = vlaneseq
    %v878 = vshrl.u32 %v877, 7
    %v879 = vsub.s32 0, %v878
    %v880 = vrot.slane %v875, %v879
    %v881 = vlaneseq
    %v882 = vshrl.u32 %v881, 7
    %v883 = vsub.s32 1, %v882
    %v884 = vrot.slane %v875, %v883
    %v919 = vunpack.c.l.b16 %v842
    %v920 = vunpack.c.h.b16 %v842
    %v921 = vunpack.c.l.b16 %v843
    %v922 = vunpack.c.h.b16 %v843
    %v923 = vunpack.c.l.b16 %v844
    %v924 = vunpack.c.h.b16 %v844
    %v925 = vunpack.c.l.b16 %v845
    %v926 = vunpack.c.h.b16 %v845
    %v927 = vunpack.c.l.b16 %v846
    %v928 = vunpack.c.h.b16 %v846
    %v929 = vunpack.c.l.b16 %v847
    %v930 = vunpack.c.h.b16 %v847
    %v931 = vunpack.c.l.b16 %v848
    %v932 = vunpack.c.h.b16 %v848
    %v933 = vunpack.c.l.b16 %v849
    %v934 = vunpack.c.h.b16 %v849
    %v935 = vunpack.c.l.b16 %v850
    %v936 = vunpack.c.h.b16 %v850
    %v937 = vunpack.c.l.b16 %v851
    %v938 = vunpack.c.h.b16 %v851
    %v939 = vunpack.c.l.b16 %v852
    %v940 = vunpack.c.h.b16 %v852
    %v941 = vunpack.c.l.b16 %v853
    %v942 = vunpack.c.h.b16 %v853
    %v943 = vunpack.c.l.b16 %v854
    %v944 = vunpack.c.h.b16 %v854
    %v945 = vunpack.c.l.b16 %v855
    %v946 = vunpack.c.h.b16 %v855
    %v947 = vunpack.c.l.b16 %v856
    %v948 = vunpack.c.h.b16 %v856
    %v949 = vunpack.c.l.b16 %v857
    %v950 = vunpack.c.h.b16 %v857
    %v951 = vunpack.c.l.b16 %v858
    %v952 = vunpack.c.h.b16 %v858
    %v953 = vunpack.c.l.b16 %v859
    %v954 = vunpack.c.h.b16 %v859
    %v955 = vunpack.c.l.b16 %v860
    %v956 = vunpack.c.h.b16 %v860
    %v957 = vunpack.c.l.b16 %v861
    %v958 = vunpack.c.h.b16 %v861
    %v959 = vunpack.c.l.b16 %v862
    %v960 = vunpack.c.h.b16 %v862
    %v961 = vunpack.c.l.b16 %v863
    %v962 = vunpack.c.h.b16 %v863
    %v963 = vunpack.c.l.b16 %v864
    %v964 = vunpack.c.h.b16 %v864
    %v965 = vunpack.c.l.b16 %v865
    %v966 = vunpack.c.h.b16 %v865
    %v967 = vunpack.c.l.b16 %v866
    %v968 = vunpack.c.h.b16 %v866
    %v969 = vunpack.c.l.b16 %v867
    %v970 = vunpack.c.h.b16 %v867
    %v971 = vunpack.c.l.b16 %v868
    %v972 = vunpack.c.h.b16 %v868
    %v973 = vunpack.c.l.b16 %v869
    %v974 = vunpack.c.h.b16 %v869
    %v975 = vunpack.c.l.b16 %v870
    %v976 = vunpack.c.h.b16 %v870
    %v977 = vunpack.c.l.b16 %v871
    %v978 = vunpack.c.h.b16 %v871
    %v979 = vunpack.c.l.b16 %v872
    %v980 = vunpack.c.h.b16 %v872
    %v981 = vunpack.c.l.b16 %v873
    %v982 = vunpack.c.h.b16 %v873
    %v983 = vpack.c.b16 %v921, %v919
    %v984 = vpack.c.b16 %v922, %v920
    %v985 = vpack.c.b16 %v925, %v923
    %v986 = vpack.c.b16 %v926, %v924
    %v987 = vpack.c.b16 %v929, %v927
    %v988 = vpack.c.b16 %v930, %v928
    %v989 = vpack.c.b16 %v933, %v931
    %v990 = vpack.c.b16 %v934, %v932
    %v991 = vpack.c.b16 %v937, %v935
    %v992 = vpack.c.b16 %v938, %v936
    %v993 = vpack.c.b16 %v941, %v939
    %v994 = vpack.c.b16 %v942, %v940
    %v995 = vpack.c.b16 %v945, %v943
    %v996 = vpack.c.b16 %v946, %v944
    %v997 = vpack.c.b16 %v949, %v947
    %v998 = vpack.c.b16 %v950, %v948
    %v999 = vpack.c.b16 %v953, %v951
    %v1000 = vpack.c.b16 %v954, %v952
    %v1001 = vpack.c.b16 %v957, %v955
    %v1002 = vpack.c.b16 %v958, %v956
    %v1003 = vpack.c.b16 %v961, %v959
    %v1004 = vpack.c.b16 %v962, %v960
    %v1005 = vpack.c.b16 %v965, %v963
    %v1006 = vpack.c.b16 %v966, %v964
    %v1007 = vpack.c.b16 %v969, %v967
    %v1008 = vpack.c.b16 %v970, %v968
    %v1009 = vpack.c.b16 %v973, %v971
    %v1010 = vpack.c.b16 %v974, %v972
    %v1011 = vpack.c.b16 %v977, %v975
    %v1012 = vpack.c.b16 %v978, %v976
    %v1013 = vpack.c.b16 %v981, %v979
    %v1014 = vpack.c.b16 %v982, %v980
    %1047 = vmatprep.subr.bf16.mxu0 %v984
    %1048 = vmatpush1.bf16.msra.mxu0 %v983
    %1049 = vmatprep.subr.bf16.mxu0 %v986
    %1050 = vmatpush1.bf16.msra.mxu0 %v985
    %1051 = vmatprep.subr.bf16.mxu0 %v988
    %1052 = vmatpush1.bf16.msra.mxu0 %v987
    %1053 = vmatprep.subr.bf16.mxu0 %v990
    %1054 = vmatpush1.bf16.msra.mxu0 %v989
    %1055 = vmatprep.subr.bf16.mxu0 %v992
    %1056 = vmatpush1.bf16.msra.mxu0 %v991
    %1057 = vmatprep.subr.bf16.mxu0 %v994
    %1058 = vmatpush1.bf16.msra.mxu0 %v993
    %1059 = vmatprep.subr.bf16.mxu0 %v996
    %1060 = vmatpush1.bf16.msra.mxu0 %v995
    %1061 = vmatprep.subr.bf16.mxu0 %v998
    %1062 = vmatpush1.bf16.msra.mxu0 %v997
    %1063 = vmatprep.subr.bf16.mxu0 %v1000
    %1064 = vmatpush1.bf16.msra.mxu0 %v999
    %1065 = vmatprep.subr.bf16.mxu0 %v1002
    %1066 = vmatpush1.bf16.msra.mxu0 %v1001
    %1067 = vmatprep.subr.bf16.mxu0 %v1004
    %1068 = vmatpush1.bf16.msra.mxu0 %v1003
    %1069 = vmatprep.subr.bf16.mxu0 %v1006
    %1070 = vmatpush1.bf16.msra.mxu0 %v1005
    %1071 = vmatprep.subr.bf16.mxu0 %v1008
    %1072 = vmatpush1.bf16.msra.mxu0 %v1007
    %1073 = vmatprep.subr.bf16.mxu0 %v1010
    %1074 = vmatpush1.bf16.msra.mxu0 %v1009
    %1075 = vmatprep.subr.bf16.mxu0 %v1012
    %1076 = vmatpush1.bf16.msra.mxu0 %v1011
    %1077 = vmatprep.subr.bf16.mxu0 %v1014
    %1078 = vmatpush1.bf16.msra.mxu0 %v1013
    %1079 = vmatprep.mubr.bf16.mxu0 %v840
    %1080 = vmatmul.mubr.bf16.gmra.mrb[0].mxu0 %v839
    %v1081 = vpop.f32.mrb[0].mxu0
    %v1082 = vadd.f32 %v880, %v1081
    %v1083 = vpop.f32.mrb[0].mxu0
    %v1084 = vadd.f32 %v884, %v1083
    %v1085 = vpop.f32.mrb[0].mxu0
    %v1086 = vpop.f32.mrb[0].mxu0
    %1087 = vdwg.mxu0
    %v1088 = vmax.f32 %v1082, 0.0
    %v1089 = vmax.f32 %v1084, 0.0
    %v1090 = vpack.c.bf16 %v1088, %v1088
    %v1091 = vpack.c.bf16 %v1089, %v1089
    %v1092 = vld [vmem:[%s4] sm:$0xff]
    %v1093 = vld [vmem:[%s4 + $0x8] sm:$0xff]
    %v1094 = vld [vmem:[%s4 + $0x10] sm:$0xff]
    %v1095 = vld [vmem:[%s4 + $0x18] sm:$0xff]
    %v1096 = vld [vmem:[%s4 + $0x20] sm:$0xff]
    %v1097 = vld [vmem:[%s4 + $0x28] sm:$0xff]
    %v1098 = vld [vmem:[%s4 + $0x30] sm:$0xff]
    %v1099 = vld [vmem:[%s4 + $0x38] sm:$0xff]
    %v1100 = vld [vmem:[%s4 + $0x40] sm:$0xff]
    %v1101 = vld [vmem:[%s4 + $0x48] sm:$0xff]
    %v1102 = vld [vmem:[%s4 + $0x50] sm:$0xff]
    %v1103 = vld [vmem:[%s4 + $0x58] sm:$0xff]
    %v1104 = vld [vmem:[%s4 + $0x60] sm:$0xff]
    %v1105 = vld [vmem:[%s4 + $0x68] sm:$0xff]
    %v1106 = vld [vmem:[%s4 + $0x70] sm:$0xff]
    %v1107 = vld [vmem:[%s4 + $0x78] sm:$0xff]
    %v1108 = vld [vmem:[%s4 + $0x80] sm:$0xff]
    %v1109 = vld [vmem:[%s4 + $0x88] sm:$0xff]
    %v1110 = vld [vmem:[%s4 + $0x90] sm:$0xff]
    %v1111 = vld [vmem:[%s4 + $0x98] sm:$0xff]
    %v1112 = vld [vmem:[%s4 + $0xa0] sm:$0xff]
    %v1113 = vld [vmem:[%s4 + $0xa8] sm:$0xff]
    %v1114 = vld [vmem:[%s4 + $0xb0] sm:$0xff]
    %v1115 = vld [vmem:[%s4 + $0xb8] sm:$0xff]
    %v1116 = vld [vmem:[%s4 + $0xc0] sm:$0xff]
    %v1117 = vld [vmem:[%s4 + $0xc8] sm:$0xff]
    %v1118 = vld [vmem:[%s4 + $0xd0] sm:$0xff]
    %v1119 = vld [vmem:[%s4 + $0xd8] sm:$0xff]
    %v1120 = vld [vmem:[%s4 + $0xe0] sm:$0xff]
    %v1121 = vld [vmem:[%s4 + $0xe8] sm:$0xff]
    %v1122 = vld [vmem:[%s4 + $0xf0] sm:$0xff]
    %v1123 = vld [vmem:[%s4 + $0xf8] sm:$0xff]
    %s1124 = scalar_lea.vmem %s5, 4
    %v1125 = vld [vmem:[%s1124] ss:$8 sm:$0x3]
    %v1127 = vlaneseq
    %v1128 = vshrl.u32 %v1127, 7
    %v1129 = vsub.s32 0, %v1128
    %v1130 = vrot.slane %v1125, %v1129
    %v1131 = vlaneseq
    %v1132 = vshrl.u32 %v1131, 7
    %v1133 = vsub.s32 1, %v1132
    %v1134 = vrot.slane %v1125, %v1133
    %v1169 = vunpack.c.l.b16 %v1092
    %v1170 = vunpack.c.h.b16 %v1092
    %v1171 = vunpack.c.l.b16 %v1093
    %v1172 = vunpack.c.h.b16 %v1093
    %v1173 = vunpack.c.l.b16 %v1094
    %v1174 = vunpack.c.h.b16 %v1094
    %v1175 = vunpack.c.l.b16 %v1095
    %v1176 = vunpack.c.h.b16 %v1095
    %v1177 = vunpack.c.l.b16 %v1096
    %v1178 = vunpack.c.h.b16 %v1096
    %v1179 = vunpack.c.l.b16 %v1097
    %v1180 = vunpack.c.h.b16 %v1097
    %v1181 = vunpack.c.l.b16 %v1098
    %v1182 = vunpack.c.h.b16 %v1098
    %v1183 = vunpack.c.l.b16 %v1099
    %v1184 = vunpack.c.h.b16 %v1099
    %v1185 = vunpack.c.l.b16 %v1100
    %v1186 = vunpack.c.h.b16 %v1100
    %v1187 = vunpack.c.l.b16 %v1101
    %v1188 = vunpack.c.h.b16 %v1101
    %v1189 = vunpack.c.l.b16 %v1102
    %v1190 = vunpack.c.h.b16 %v1102
    %v1191 = vunpack.c.l.b16 %v1103
    %v1192 = vunpack.c.h.b16 %v1103
    %v1193 = vunpack.c.l.b16 %v1104
    %v1194 = vunpack.c.h.b16 %v1104
    %v1195 = vunpack.c.l.b16 %v1105
    %v1196 = vunpack.c.h.b16 %v1105
    %v1197 = vunpack.c.l.b16 %v1106
    %v1198 = vunpack.c.h.b16 %v1106
    %v1199 = vunpack.c.l.b16 %v1107
    %v1200 = vunpack.c.h.b16 %v1107
    %v1201 = vunpack.c.l.b16 %v1108
    %v1202 = vunpack.c.h.b16 %v1108
    %v1203 = vunpack.c.l.b16 %v1109
    %v1204 = vunpack.c.h.b16 %v1109
    %v1205 = vunpack.c.l.b16 %v1110
    %v1206 = vunpack.c.h.b16 %v1110
    %v1207 = vunpack.c.l.b16 %v1111
    %v1208 = vunpack.c.h.b16 %v1111
    %v1209 = vunpack.c.l.b16 %v1112
    %v1210 = vunpack.c.h.b16 %v1112
    %v1211 = vunpack.c.l.b16 %v1113
    %v1212 = vunpack.c.h.b16 %v1113
    %v1213 = vunpack.c.l.b16 %v1114
    %v1214 = vunpack.c.h.b16 %v1114
    %v1215 = vunpack.c.l.b16 %v1115
    %v1216 = vunpack.c.h.b16 %v1115
    %v1217 = vunpack.c.l.b16 %v1116
    %v1218 = vunpack.c.h.b16 %v1116
    %v1219 = vunpack.c.l.b16 %v1117
    %v1220 = vunpack.c.h.b16 %v1117
    %v1221 = vunpack.c.l.b16 %v1118
    %v1222 = vunpack.c.h.b16 %v1118
    %v1223 = vunpack.c.l.b16 %v1119
    %v1224 = vunpack.c.h.b16 %v1119
    %v1225 = vunpack.c.l.b16 %v1120
    %v1226 = vunpack.c.h.b16 %v1120
    %v1227 = vunpack.c.l.b16 %v1121
    %v1228 = vunpack.c.h.b16 %v1121
    %v1229 = vunpack.c.l.b16 %v1122
    %v1230 = vunpack.c.h.b16 %v1122
    %v1231 = vunpack.c.l.b16 %v1123
    %v1232 = vunpack.c.h.b16 %v1123
    %v1233 = vpack.c.b16 %v1171, %v1169
    %v1234 = vpack.c.b16 %v1172, %v1170
    %v1235 = vpack.c.b16 %v1175, %v1173
    %v1236 = vpack.c.b16 %v1176, %v1174
    %v1237 = vpack.c.b16 %v1179, %v1177
    %v1238 = vpack.c.b16 %v1180, %v1178
    %v1239 = vpack.c.b16 %v1183, %v1181
    %v1240 = vpack.c.b16 %v1184, %v1182
    %v1241 = vpack.c.b16 %v1187, %v1185
    %v1242 = vpack.c.b16 %v1188, %v1186
    %v1243 = vpack.c.b16 %v1191, %v1189
    %v1244 = vpack.c.b16 %v1192, %v1190
    %v1245 = vpack.c.b16 %v1195, %v1193
    %v1246 = vpack.c.b16 %v1196, %v1194
    %v1247 = vpack.c.b16 %v1199, %v1197
    %v1248 = vpack.c.b16 %v1200, %v1198
    %v1249 = vpack.c.b16 %v1203, %v1201
    %v1250 = vpack.c.b16 %v1204, %v1202
    %v1251 = vpack.c.b16 %v1207, %v1205
    %v1252 = vpack.c.b16 %v1208, %v1206
    %v1253 = vpack.c.b16 %v1211, %v1209
    %v1254 = vpack.c.b16 %v1212, %v1210
    %v1255 = vpack.c.b16 %v1215, %v1213
    %v1256 = vpack.c.b16 %v1216, %v1214
    %v1257 = vpack.c.b16 %v1219, %v1217
    %v1258 = vpack.c.b16 %v1220, %v1218
    %v1259 = vpack.c.b16 %v1223, %v1221
    %v1260 = vpack.c.b16 %v1224, %v1222
    %v1261 = vpack.c.b16 %v1227, %v1225
    %v1262 = vpack.c.b16 %v1228, %v1226
    %v1263 = vpack.c.b16 %v1231, %v1229
    %v1264 = vpack.c.b16 %v1232, %v1230
    %1297 = vmatprep.subr.bf16.mxu0 %v1234
    %1298 = vmatpush1.bf16.msra.mxu0 %v1233
    %1299 = vmatprep.subr.bf16.mxu0 %v1236
    %1300 = vmatpush1.bf16.msra.mxu0 %v1235
    %1301 = vmatprep.subr.bf16.mxu0 %v1238
    %1302 = vmatpush1.bf16.msra.mxu0 %v1237
    %1303 = vmatprep.subr.bf16.mxu0 %v1240
    %1304 = vmatpush1.bf16.msra.mxu0 %v1239
    %1305 = vmatprep.subr.bf16.mxu0 %v1242
    %1306 = vmatpush1.bf16.msra.mxu0 %v1241
    %1307 = vmatprep.subr.bf16.mxu0 %v1244
    %1308 = vmatpush1.bf16.msra.mxu0 %v1243
    %1309 = vmatprep.subr.bf16.mxu0 %v1246
    %1310 = vmatpush1.bf16.msra.mxu0 %v1245
    %1311 = vmatprep.subr.bf16.mxu0 %v1248
    %1312 = vmatpush1.bf16.msra.mxu0 %v1247
    %1313 = vmatprep.subr.bf16.mxu0 %v1250
    %1314 = vmatpush1.bf16.msra.mxu0 %v1249
    %1315 = vmatprep.subr.bf16.mxu0 %v1252
    %1316 = vmatpush1.bf16.msra.mxu0 %v1251
    %1317 = vmatprep.subr.bf16.mxu0 %v1254
    %1318 = vmatpush1.bf16.msra.mxu0 %v1253
    %1319 = vmatprep.subr.bf16.mxu0 %v1256
    %1320 = vmatpush1.bf16.msra.mxu0 %v1255
    %1321 = vmatprep.subr.bf16.mxu0 %v1258
    %1322 = vmatpush1.bf16.msra.mxu0 %v1257
    %1323 = vmatprep.subr.bf16.mxu0 %v1260
    %1324 = vmatpush1.bf16.msra.mxu0 %v1259
    %1325 = vmatprep.subr.bf16.mxu0 %v1262
    %1326 = vmatpush1.bf16.msra.mxu0 %v1261
    %1327 = vmatprep.subr.bf16.mxu0 %v1264
    %1328 = vmatpush1.bf16.msra.mxu0 %v1263
    %1329 = vmatprep.mubr.bf16.mxu0 %v1091
    %1330 = vmatmul.mubr.bf16.gmra.mrb[0].mxu0 %v1090
    %v1331 = vpop.f32.mrb[0].mxu0
    %v1332 = vadd.f32 %v1130, %v1331
    %v1333 = vpop.f32.mrb[0].mxu0
    %v1334 = vadd.f32 %v1134, %v1333
    %v1335 = vpop.f32.mrb[0].mxu0
    %v1336 = vpop.f32.mrb[0].mxu0
    %1337 = vdwg.mxu0
    %1338 = vst [vmem:[#allocation6] sm:$0xff] %v1332
    %vm1339 = vcmask 523264
    %1340 = vst.msk [vmem:[#allocation6 + $0x8] sm:$0xff] %vm1339, %v1334
    // Predicated region
    $region30: #{comrade_forward.1} parent=1 // pred_check
      _
    $region31: #{comrade_forward.1} parent=1 // pred_check_branch
      %1342 = sbr.rel (0) target = $region33
    $region32: #{comrade_forward.1} parent=1 // pred_region
      %s1344 = ssub.s32 256, 256
      %1345 = vsyncadd [#allocation5], %s1344
      %s1347 = sshll.u32 [#allocation6], 4
      %s1348 = int_to_ptr.vmem [resolvable:$true] %s1347
      %1350 = dma.vmem_to_hbm [thread:$0]  %s1348, 256, %s6, [#allocation5]
    $region33: #{comrade_forward.1} parent=1 // pred_fallthru
      _
    // Predicated region
    $region34: #{comrade_forward.1} parent=1 // pred_check
      _
    $region35: #{comrade_forward.1} parent=1 // pred_check_branch
      %1352 = sbr.rel (0) target = $region37
    $region36: #{comrade_forward.1} parent=1 // pred_region
      %1353 = dma.done [#allocation5], 256
    $region37: #{comrade_forward.1} parent=1 // pred_fallthru
      _
    %1354 = vsyncpa [#allocation4], 1
    %1355 = vsyncpa [#allocation5], 1

</llo_original>
